<compile_context>
chip_gen: v7x
topology: tpu7x:2x2x1
jax: 0.10.0
libtpu: 0.0.40
codegen_flags: <defaults>
</compile_context>

<pallas_src>
import functools

import jax
import jax.numpy as jnp
from jax.experimental import pallas as pl
from jax.experimental.pallas import tpu as pltpu


def bigram_kernel(v_real, idx_sref, tgt_sref, row_ref, logits_ref, loss_ref):
    # idx_sref:   (N,) int32 SMEM  -- scalar-prefetched; consumed by index_maps
    # tgt_sref:   (N,) int32 SMEM  -- scalar-prefetched targets
    # row_ref:    (1, 1, Vp) f32   -- table row idx[i], gathered via BlockSpec DMA
    # logits_ref: (1, 1, Vp) f32   -- row i of the padded logits output
    # loss_ref:   (1, 1, 1)  f32   -- per-row partial cross-entropy
    del idx_sref  # only needed by the index_map, not the body
    i = pl.program_id(0)

    row = row_ref[...]                                        # (1, 1, Vp)
    logits_ref[...] = row                                     # exact table row copy

    vp = row.shape[-1]
    col = jax.lax.broadcasted_iota(jnp.int32, (1, 1, vp), 2)
    valid = col < v_real

    # logsumexp over the real vocab lanes only (padded lanes masked out).
    m = jnp.max(jnp.where(valid, row, -jnp.inf), axis=-1, keepdims=True)
    ex = jnp.where(valid, jnp.exp(row - m), 0.0)
    lse = m + jnp.log(jnp.sum(ex, axis=-1, keepdims=True))

    # picked logit = row[target_i] via a lane mask (target is always < V).
    tgt_i = tgt_sref[i]
    picked = jnp.sum(jnp.where(col == tgt_i, row, 0.0), axis=-1, keepdims=True)

    loss_ref[...] = lse - picked


def bigram_forward(idx, targets, table):
    """Pallas forward pass of BigramLanguageModel.

    idx:     (B, T) int32
    targets: (B, T) int32
    table:   (V, V) float32
    returns: logits (B, T, V) float32, loss () float32
    """
    B, T = idx.shape
    V = table.shape[0]
    N = B * T
    Vp = ((V + 127) // 128) * 128

    # Pad the vocab (lane) axis to 128 for lane-dense stores / full-width reductions.
    table_p = jnp.pad(table, ((0, 0), (0, Vp - V))) if Vp != V else table
    table_p = table_p.reshape(V, 1, Vp)

    idx_flat = idx.reshape(N).astype(jnp.int32)
    tgt_flat = targets.reshape(N).astype(jnp.int32)

    grid_spec = pltpu.PrefetchScalarGridSpec(
        num_scalar_prefetch=2,
        grid=(N,),
        in_specs=[
            # Data-dependent row gather: grid step i fetches table row idx[i].
            pl.BlockSpec((1, 1, Vp), lambda i, idx_ref, tgt_ref: (idx_ref[i], 0, 0)),
        ],
        out_specs=(
            pl.BlockSpec((1, 1, Vp), lambda i, idx_ref, tgt_ref: (i, 0, 0)),
            pl.BlockSpec((1, 1, 1), lambda i, idx_ref, tgt_ref: (i, 0, 0)),
        ),
    )

    cost = pl.CostEstimate(
        flops=6 * N * Vp,
        transcendentals=N * (Vp + 1),
        bytes_accessed=2 * N * Vp * 4 + N * 8,
    )

    logits_p, partial = pl.pallas_call(
        functools.partial(bigram_kernel, V),
        grid_spec=grid_spec,
        out_shape=(
            jax.ShapeDtypeStruct((N, 1, Vp), jnp.float32),
            jax.ShapeDtypeStruct((N, 1, 1), jnp.float32),
        ),
        compiler_params=pltpu.CompilerParams(
            dimension_semantics=("parallel",),
        ),
        cost_estimate=cost,
    )(idx_flat, tgt_flat, table_p)

    logits = logits_p[:, 0, :V].reshape(B, T, V)
    loss = jnp.sum(partial) / N
    return logits, loss


if __name__ == "__main__":
    # Small, deterministic setup consistent with the module:
    # vocab_size = 65 (char-level), batch=2, seq=8.
    V, B, T = 65, 2, 8
    key = jax.random.PRNGKey(0)
    k_tab, k_idx, k_tgt = jax.random.split(key, 3)

    # nn.Embedding default init is N(0, 1).
    table = jax.random.normal(k_tab, (V, V), dtype=jnp.float32)
    idx = jax.random.randint(k_idx, (B, T), 0, V, dtype=jnp.int32)
    targets = jax.random.randint(k_tgt, (B, T), 0, V, dtype=jnp.int32)

    logits, loss = bigram_forward(idx, targets, table)
    jax.block_until_ready((logits, loss))

    # Pure-JAX reference check (same semantics as the PyTorch forward).
    ref_logits = table[idx]                                  # (B, T, V)
    fl = ref_logits.reshape(B * T, V)
    ft = targets.reshape(B * T)
    ref_loss = jnp.mean(
        jax.nn.logsumexp(fl, axis=-1) - fl[jnp.arange(B * T), ft]
    )
    assert jnp.allclose(logits, ref_logits, atol=1e-5), "logits mismatch"
    assert jnp.allclose(loss, ref_loss, atol=1e-5), "loss mismatch"

    # TODO(synk): generate() (autoregressive multinomial sampling) is a host-side
    # loop with RNG; it would reuse this forward kernel but is not itself a Pallas kernel.
    print("KERNEL_OK")
</pallas_src>

<mosaic_0001>
module attributes {stable_mosaic.version = 11 : i64} {
  func.func @bigram_kernel(%arg0: i32, %arg1: memref<16xi32, #tpu.memory_space<smem>>, %arg2: memref<16xi32, #tpu.memory_space<smem>>, %arg3: memref<1x1x128xf32, #tpu.memory_space<vmem>>, %arg4: memref<1x1x128xf32, #tpu.memory_space<vmem>>, %arg5: memref<1x1x1xf32, #tpu.memory_space<vmem>>) attributes {dimension_semantics = [#tpu.dimension_semantics<parallel>], iteration_bounds = array<i64: 16>, scalar_prefetch = 2 : i64, scratch_operands = 0 : i64, tpu.core_type = #tpu.core_type<tc>, window_params = [{transform_indices = @transform_0, window_bounds = array<i64: 1, 1, 128>}, {transform_indices = @transform_1, window_bounds = array<i64: 1, 1, 128>}, {transform_indices = @transform_2, window_bounds = array<i64: 1, 1, 1>}]} {
    %c0 = arith.constant 0 : index
    %c0_0 = arith.constant 0 : index
    %c0_1 = arith.constant 0 : index
    %0 = vector.load %arg3[%c0, %c0_0, %c0_1] : memref<1x1x128xf32, #tpu.memory_space<vmem>>, vector<1x1x128xf32>
    %c0_2 = arith.constant 0 : index
    %c0_3 = arith.constant 0 : index
    %c0_4 = arith.constant 0 : index
    %1 = vector.load %arg4[%c0_2, %c0_3, %c0_4] : memref<1x1x128xf32, #tpu.memory_space<vmem>>, vector<1x1x128xf32>
    tpu.vector_store %arg4[%c0_2, %c0_3, %c0_4], %0 {strides = array<i32>} : memref<1x1x128xf32, #tpu.memory_space<vmem>>, vector<1x1x128xf32>,
    %2 = tpu.iota {dimensions = array<i32: 2>} : vector<1x1x128xi32>
    %c65_i32 = arith.constant 65 : i32
    %3 = vector.broadcast %c65_i32 : i32 to vector<1x1x128xi32>
    %4 = arith.cmpi slt, %2, %3 : vector<1x1x128xi32>
    %cst = arith.constant 0xFF800000 : f32
    %5 = vector.broadcast %cst : f32 to vector<1x1x128xf32>
    %6 = arith.select %4, %0, %5 : vector<1x1x128xi1>, vector<1x1x128xf32>
    %cst_5 = arith.constant dense<0xFF800000> : vector<1x1xf32>
    %7 = vector.multi_reduction <maximumf>, %6, %cst_5 [2] : vector<1x1x128xf32> to vector<1x1xf32>
    %8 = vector.shape_cast %7 : vector<1x1xf32> to vector<1x1x1xf32>
    %9 = vector.broadcast %8 : vector<1x1x1xf32> to vector<1x1x128xf32>
    %10 = arith.subf %0, %9 : vector<1x1x128xf32>
    %11 = math.exp %10 : vector<1x1x128xf32>
    %cst_6 = arith.constant 0.000000e+00 : f32
    %12 = vector.broadcast %cst_6 : f32 to vector<1x1x128xf32>
    %13 = arith.select %4, %11, %12 : vector<1x1x128xi1>, vector<1x1x128xf32>
    %cst_7 = arith.constant dense<0.000000e+00> : vector<1x1xf32>
    %14 = vector.multi_reduction <add>, %13, %cst_7 [2] : vector<1x1x128xf32> to vector<1x1xf32>
    %15 = vector.shape_cast %14 : vector<1x1xf32> to vector<1x1x1xf32>
    %16 = math.log %15 : vector<1x1x1xf32>
    %17 = arith.addf %8, %16 : vector<1x1x1xf32>
    %18 = arith.index_cast %arg0 : i32 to index
    %19 = memref.load %arg2[%18] : memref<16xi32, #tpu.memory_space<smem>>
    %20 = vector.broadcast %19 : i32 to vector<1x1x128xi32>
    %21 = arith.cmpi eq, %2, %20 : vector<1x1x128xi32>
    %cst_8 = arith.constant 0.000000e+00 : f32
    %22 = vector.broadcast %cst_8 : f32 to vector<1x1x128xf32>
    %23 = arith.select %21, %0, %22 : vector<1x1x128xi1>, vector<1x1x128xf32>
    %cst_9 = arith.constant dense<0.000000e+00> : vector<1x1xf32>
    %24 = vector.multi_reduction <add>, %23, %cst_9 [2] : vector<1x1x128xf32> to vector<1x1xf32>
    %25 = vector.shape_cast %24 : vector<1x1xf32> to vector<1x1x1xf32>
    %26 = arith.subf %17, %25 : vector<1x1x1xf32>
    %c0_10 = arith.constant 0 : index
    %c0_11 = arith.constant 0 : index
    %c0_12 = arith.constant 0 : index
    %27 = vector.load %arg5[%c0_10, %c0_11, %c0_12] : memref<1x1x1xf32, #tpu.memory_space<vmem>>, vector<1x1x1xf32>
    tpu.vector_store %arg5[%c0_10, %c0_11, %c0_12], %26 {strides = array<i32>} : memref<1x1x1xf32, #tpu.memory_space<vmem>>, vector<1x1x1xf32>,
    return
  }
  func.func @transform_0(%arg0: i32, %arg1: memref<16xi32, #tpu.memory_space<smem>>, %arg2: memref<16xi32, #tpu.memory_space<smem>>) -> (i32, i32, i32) {
    %0 = arith.index_cast %arg0 : i32 to index
    %1 = memref.load %arg1[%0] : memref<16xi32, #tpu.memory_space<smem>>
    %c0_i32 = arith.constant 0 : i32
    %c0_i32_0 = arith.constant 0 : i32
    %c0_i32_1 = arith.constant 0 : i32
    return %1, %c0_i32, %c0_i32_0 : i32, i32, i32
  }
  func.func @transform_1(%arg0: i32, %arg1: memref<16xi32, #tpu.memory_space<smem>>, %arg2: memref<16xi32, #tpu.memory_space<smem>>) -> (i32, i32, i32) {
    %c0_i32 = arith.constant 0 : i32
    %c0_i32_0 = arith.constant 0 : i32
    %c0_i32_1 = arith.constant 0 : i32
    return %arg0, %c0_i32, %c0_i32_0 : i32, i32, i32
  }
  func.func @transform_2(%arg0: i32, %arg1: memref<16xi32, #tpu.memory_space<smem>>, %arg2: memref<16xi32, #tpu.memory_space<smem>>) -> (i32, i32, i32) {
    %c0_i32 = arith.constant 0 : i32
    %c0_i32_0 = arith.constant 0 : i32
    %c0_i32_1 = arith.constant 0 : i32
    return %arg0, %c0_i32, %c0_i32_0 : i32, i32, i32
  }
}

</mosaic_0001>

<llo_original>
// kernel: tpu_custom_call.1
$region0: #{tpu_custom_call.1}
  #allocation0 [shape = 'u32[]', space=smem, size = 0x4, offset = 0x4, fixed_abs, tag = 'smem constant byte address 0x4 - core index']
  #allocation1 [shape = 'u32[144,128]{1,0:T(1,128)}', space=vmem, size = 0x12000, scoped, tag = 'internal scratch']
  #allocation2 [shape = 's32[1]{0}', space=sflag, size = 0x4, scoped, tag = 'scoped memory for tpu_custom_call.1']
  #allocation3 [shape = 'u8[512]{0}', space=smem, size = 0x200, scoped, tag = 'prefetched SMEM operand 0']
  #allocation4 [shape = 'u8[512]{0}', space=smem, size = 0x200, scoped, tag = 'prefetched SMEM operand 1']
  %s0 = inlined_call_operand.hbm [shape: s32[16], index: 0, kind: input, shape index: {}]
  %s1 = inlined_call_operand.vmem [shape: s32[16], index: 1, kind: input, shape index: {}]
  %s2 = inlined_call_operand.hbm [shape: f32[65,1,128], index: 2, kind: input, shape index: {}]
  %s3 = inlined_call_operand.hbm [shape: f32[16,1,128], index: 3, kind: output, shape index: {0}]
  %s4 = inlined_call_operand.vmem [shape: f32[16,1,1], index: 4, kind: output, shape index: {1}]
  %5 = xla_tuple %s3, %s4
  %s6 = sld [smem:[#allocation0]]
  $region49: #{tpu_custom_call.1} parent=0
    _
  %s8 = ssub.s32 1, %s6
  %s9 = scalar_select 0, %s8, %s6
  %11 = dma.hbm_to_smem %s0, 16, [#allocation3], [#allocation2]
  %s12 = sshll.u32 %s1, 4
  %s13 = int_to_ptr.vmem [resolvable:$true] %s12
  %15 = dma.vmem_to_smem %s13, 16, [#allocation4], [#allocation2]
  %16 = dma.done [#allocation2], 32
  %17 = sfence
  $region1: #{tpu_custom_call.1} parent=0
    #allocation5 [shape = 'u8[1024]{0}', space=vmem, size = 0x400, scoped, tag = 'input window, operand 2']
    #allocation6 [shape = 's32[2]{0}', space=sflag, size = 0x8, scoped, tag = 'scoped memory for tpu_custom_call.1']
    #allocation7 [shape = 's32[2]{0}', space=sflag, size = 0x8, scoped, tag = 'scoped memory for tpu_custom_call.1']
    #allocation8 [shape = 'u8[1024]{0}', space=vmem, size = 0x400, scoped, tag = 'output window, operand 0']
    %18 = vsyncpa [#allocation6], 0
    %s19 = scalar_lea.sflag [#allocation6], 1
    %20 = vsyncpa %s19, 0
    %21 = vsyncpa [#allocation7], 0
    %s22 = scalar_lea.sflag [#allocation7], 1
    %23 = vsyncpa %s22, 0
    loop: start=0, step=1, limit=18
    $region2: #{tpu_custom_call.1} parent=1 // loop_pre_header
      _
    $region3: #{tpu_custom_call.1} parent=1 // loop_header
      %s25 = sphi 0, %s29
      %p26 = scmp.ge.s32.totalorder %s25, 18
      %s37 = sphi 0, %s39
      %s40 = sphi 0, %s37
      %s41 = sphi 0, %s40
      %s57 = sphi 0, %s41
      %s63 = sphi 0, %s65
      %s66 = sphi 0, %s63
      %s67 = sphi 0, %s66
      %s83 = sphi 0, %s67
      %s89 = sphi 0, %s91
      %s92 = sphi 0, %s89
      %s93 = sphi 0, %s92
      %s109 = sphi 0, %s93
    $region4: #{tpu_custom_call.1} parent=1 // loop_header_branch
      %28 = sbr.rel (%p26) target = $region8
    $region5: #{tpu_custom_call.1} parent=1 // loop_body
      %s30 = ssub.s32 %s25, 1
      %s31 = ssub.s32 %s25, 2
      %s32 = sadd.s32 %s25, 1
      %s33 = sld [smem:[#allocation3 + %s25]]
      %s34 = sld [smem:[#allocation3 + %s32]]
      %s35 = ssub.s32 %s33, %s34
      %p36 = scmp.eq.s32.totalorder %s35, 0
      %s38 = sadd.s32 %s37, 1
      %s39 = scalar_select %p36, %s37, %s38
      %p42 = pneg %p36
      %p43 = scmp.eq.s32.totalorder %s25, 15
      %p44 = por %p42, %p43
      %p45 = scmp.ne.s32.totalorder %s37, %s40
      %p46 = scmp.eq.s32.totalorder %s25, 0
      %p47 = por %p45, %p46
      %p48 = scmp.ne.s32.totalorder %s37, %s40
      %p49 = scmp.eq.s32.totalorder %s30, 15
      %p50 = por %p48, %p49
      %p51 = scmp.ne.s32.totalorder %s40, %s41
      %p52 = scmp.eq.s32.totalorder %s30, 0
      %p53 = por %p51, %p52
      %p54 = scmp.ne.s32.totalorder %s40, %s41
      %p55 = scmp.eq.s32.totalorder %s31, 15
      %p56 = por %p54, %p55
      %p58 = scmp.ne.s32.totalorder %s41, %s57
      %p59 = scmp.eq.s32.totalorder %s31, 0
      %p60 = por %p58, %p59
      %s61 = ssub.s32 %s25, %s32
      %p62 = scmp.eq.s32.totalorder %s61, 0
      %s64 = sadd.s32 %s63, 1
      %s65 = scalar_select %p62, %s63, %s64
      %p68 = pneg %p62
      %p69 = scmp.eq.s32.totalorder %s25, 15
      %p70 = por %p68, %p69
      %p71 = scmp.ne.s32.totalorder %s63, %s66
      %p72 = scmp.eq.s32.totalorder %s25, 0
      %p73 = por %p71, %p72
      %p74 = scmp.ne.s32.totalorder %s63, %s66
      %p75 = scmp.eq.s32.totalorder %s30, 15
      %p76 = por %p74, %p75
      %p77 = scmp.ne.s32.totalorder %s66, %s67
      %p78 = scmp.eq.s32.totalorder %s30, 0
      %p79 = por %p77, %p78
      %p80 = scmp.ne.s32.totalorder %s66, %s67
      %p81 = scmp.eq.s32.totalorder %s31, 15
      %p82 = por %p80, %p81
      %p84 = scmp.ne.s32.totalorder %s67, %s83
      %p85 = scmp.eq.s32.totalorder %s31, 0
      %p86 = por %p84, %p85
      %s87 = ssub.s32 %s25, %s32
      %p88 = scmp.eq.s32.totalorder %s87, 0
      %s90 = sadd.s32 %s89, 1
      %s91 = scalar_select %p88, %s89, %s90
      %p94 = pneg %p88
      %p95 = scmp.eq.s32.totalorder %s25, 15
      %p96 = por %p94, %p95
      %p97 = scmp.ne.s32.totalorder %s89, %s92
      %p98 = scmp.eq.s32.totalorder %s25, 0
      %p99 = por %p97, %p98
      %p100 = scmp.ne.s32.totalorder %s89, %s92
      %p101 = scmp.eq.s32.totalorder %s30, 15
      %p102 = por %p100, %p101
      %p103 = scmp.ne.s32.totalorder %s92, %s93
      %p104 = scmp.eq.s32.totalorder %s30, 0
      %p105 = por %p103, %p104
      %p106 = scmp.ne.s32.totalorder %s92, %s93
      %p107 = scmp.eq.s32.totalorder %s31, 15
      %p108 = por %p106, %p107
      %p110 = scmp.ne.s32.totalorder %s93, %s109
      %p111 = scmp.eq.s32.totalorder %s31, 0
      %p112 = por %p110, %p111
      %p113 = scmp.le.s32.totalorder 1, %s25
      %p114 = scmp.lt.s32.totalorder %s25, 17
      %p115 = pnand %p113, %p114
      %p116 = pneg %p115
      // Predicated region
      $region9: #{tpu_custom_call.1} parent=5 // pred_check
        _
      $region10: #{tpu_custom_call.1} parent=5 // pred_check_branch
        %118 = sbr.rel (%p115) target = $region12
      $region11: #{tpu_custom_call.1} parent=5 // pred_region
        %s119 = ssub.s32 %s25, 1
      $region12: #{tpu_custom_call.1} parent=5 // pred_fallthru
        _
      %p120 = scmp.lt.s32.totalorder %s25, 16
      // Predicated region
      $region13: #{tpu_custom_call.1} parent=5 // pred_check
        %p121 = pneg %p120
      $region14: #{tpu_custom_call.1} parent=5 // pred_check_branch
        %123 = sbr.rel (%p121) target = $region16
      $region15: #{tpu_custom_call.1} parent=5 // pred_region
        // Predicated region
        $region17: #{tpu_custom_call.1} parent=15 // pred_check
          %p124 = pneg %p47
        $region18: #{tpu_custom_call.1} parent=15 // pred_check_branch
          %126 = sbr.rel (%p124) target = $region20
        $region19: #{tpu_custom_call.1} parent=15 // pred_region
          %s127 = sand.u32 %s37, 1
          %s128 = scalar_lea.sflag [#allocation6], %s127
          %s129 = sand.u32 %s37, 1
          %s130 = scalar_lea.vmem [#allocation5], %s129
          %s131 = sld [smem:[#allocation3 + %s25]]
          %s133 = ssub.s32 16, 16
          %134 = vsyncadd %s128, %s133
          %s135 = smul.addr %s131, 16
          %s136 = scalar_lea.hbm %s2, %s135
          %s138 = sshll.u32 %s130, 4
          %s139 = int_to_ptr.vmem [resolvable:$true] %s138
          %141 = dma.hbm_to_vmem [thread:$0]  %s136, 16, %s139, %s128
        $region20: #{tpu_custom_call.1} parent=15 // pred_fallthru
          _
      $region16: #{tpu_custom_call.1} parent=5 // pred_fallthru
        _
      %p142 = scmp.le.s32.totalorder 1, %s25
      %p143 = scmp.lt.s32.totalorder %s25, 17
      %p144 = pnand %p142, %p143
      %p145 = pneg %p144
      // Predicated region
      $region21: #{tpu_custom_call.1} parent=5 // pred_check
        _
      $region22: #{tpu_custom_call.1} parent=5 // pred_check_branch
        %147 = sbr.rel (%p144) target = $region24
      $region23: #{tpu_custom_call.1} parent=5 // pred_region
        %s148 = ssub.s32 %s25, 1
        %s149 = sand.u32 %s40, 1
        %s150 = scalar_lea.sflag [#allocation6], %s149
        %s151 = sand.u32 %s40, 1
        %s152 = scalar_lea.vmem [#allocation5], %s151
        // Predicated region
        $region25: #{tpu_custom_call.1} parent=23 // pred_check
          %p153 = pneg %p53
        $region26: #{tpu_custom_call.1} parent=23 // pred_check_branch
          %155 = sbr.rel (%p153) target = $region28
        $region27: #{tpu_custom_call.1} parent=23 // pred_region
          %156 = dma.done %s150, 16
        $region28: #{tpu_custom_call.1} parent=23 // pred_fallthru
          _
        %s157 = sand.u32 %s40, 1
        %s158 = scalar_lea.sflag [#allocation6], %s157
        %s159 = sand.u32 %s40, 1
        %s160 = scalar_lea.vmem [#allocation5], %s159
        %p161 = pneg %p53
        %p162 = pneg %p50
        %p163 = pneg %p79
        %p164 = pneg %p76
        %s165 = sand.u32 %s66, 1
        %s166 = scalar_lea.sflag [#allocation7], %s165
        %s167 = sand.u32 %s66, 1
        %s168 = scalar_lea.vmem [#allocation8], %s167
        %p169 = pneg %p105
        %p170 = pneg %p102
        %p171 = scmp.lt.s32.totalorder %s30, 15
        %s172 = scalar_select %p171, %s30, 15
        %s173 = scalar_lea.vmem %s4, %s172
        %s174 = sld [smem:[#allocation3 + %s30]]
        %p175 = scmp.lt.s32.totalorder %s30, 15
        %s176 = scalar_select %p175, %s30, 15
        %s177 = scalar_lea.vmem %s4, %s176
        %v178 = vld [vmem:[%s152] sm:$0x1]
        %179 = vst [vmem:[%s168] sm:$0x1] %v178
        %v180 = vlaneseq
        %v181 = vand.u32 %v180, 127
        %vm182 = vcmp.lt.s32.totalorder %v181, 65
        %v183 = vsel %vm182, %v178, -inf
        %vm184 = vcmask 1040384
        %v185 = vsel %vm184, %v183, -inf
        %186 = vmax.xlane.f32.xlu0 %v185
        %v187 = vpop.xlane.xlu0 %186
        %v188 = vsub.f32 %v178, %v187
        %v189 = vmul.f32 %v188, 1.442695
        %v190 = vpow.pop %v189
        %v191 = vsel %vm182, %v190, 0.0
        %v192 = vsel %vm184, %v191, 0.0
        %193 = vadd.xlane.f32.xlu0 %v192
        %v194 = vpop.xlane.xlu0 %193
        %v195 = vlog2.pop %v194
        %v196 = vmul.f32 %v195, 0.6931472
        %v197 = vadd.f32 %v187, %v196
        %s198 = sld [smem:[#allocation4 + %s30]]
        %v199 = vstv %s198
        %vm200 = vcmp.eq.s32.totalorder %v181, %v199
        %v201 = vsel %vm200, %v178, 0.0
        %v202 = vsel %vm184, %v201, 0.0
        %203 = vadd.xlane.f32.xlu0 %v202
        %v204 = vpop.xlane.xlu0 %203
        %v205 = vsub.f32 %v197, %v204
        %vm206 = vcmask 0
        %207 = vst.msk [vmem:[%s177] sm:$0x1] %vm206, %v205
        %s208 = sand.u32 %s66, 1
        %s209 = scalar_lea.sflag [#allocation7], %s208
        %s210 = sand.u32 %s66, 1
        %s211 = scalar_lea.vmem [#allocation8], %s210
        %p212 = scmp.lt.s32.totalorder %s30, 15
        %s213 = scalar_select %p212, %s30, 15
        %s214 = scalar_lea.vmem %s4, %s213
        // Predicated region
        $region29: #{tpu_custom_call.1} parent=23 // pred_check
          %p215 = pneg %p76
        $region30: #{tpu_custom_call.1} parent=23 // pred_check_branch
          %217 = sbr.rel (%p215) target = $region32
        $region31: #{tpu_custom_call.1} parent=23 // pred_region
          %s219 = ssub.s32 16, 16
          %220 = vsyncadd %s209, %s219
          %s221 = smul.addr %s30, 16
          %s222 = scalar_lea.hbm %s3, %s221
          %s224 = sshll.u32 %s211, 4
          %s225 = int_to_ptr.vmem [resolvable:$true] %s224
          %227 = dma.vmem_to_hbm [thread:$0]  %s225, 16, %s222, %s209
        $region32: #{tpu_custom_call.1} parent=23 // pred_fallthru
          _
        // Predicated region
        $region33: #{tpu_custom_call.1} parent=23 // pred_check
          %p228 = pneg %p102
        $region34: #{tpu_custom_call.1} parent=23 // pred_check_branch
          %230 = sbr.rel (%p228) target = $region36
        $region35: #{tpu_custom_call.1} parent=23 // pred_region
          _
        $region36: #{tpu_custom_call.1} parent=23 // pred_fallthru
          _
      $region24: #{tpu_custom_call.1} parent=5 // pred_fallthru
        _
      %p231 = scmp.le.s32.totalorder 2, %s25
      // Predicated region
      $region37: #{tpu_custom_call.1} parent=5 // pred_check
        %p232 = pneg %p231
      $region38: #{tpu_custom_call.1} parent=5 // pred_check_branch
        %234 = sbr.rel (%p232) target = $region40
      $region39: #{tpu_custom_call.1} parent=5 // pred_region
        %s235 = ssub.s32 %s25, 2
        // Predicated region
        $region41: #{tpu_custom_call.1} parent=39 // pred_check
          %p236 = pneg %p82
        $region42: #{tpu_custom_call.1} parent=39 // pred_check_branch
          %238 = sbr.rel (%p236) target = $region44
        $region43: #{tpu_custom_call.1} parent=39 // pred_region
          %s239 = sand.u32 %s67, 1
          %s240 = scalar_lea.sflag [#allocation7], %s239
          %s241 = sand.u32 %s67, 1
          %s242 = scalar_lea.vmem [#allocation8], %s241
          %243 = dma.done %s240, 16
        $region44: #{tpu_custom_call.1} parent=39 // pred_fallthru
          _
        // Predicated region
        $region45: #{tpu_custom_call.1} parent=39 // pred_check
          %p244 = pneg %p108
        $region46: #{tpu_custom_call.1} parent=39 // pred_check_branch
          %246 = sbr.rel (%p244) target = $region48
        $region47: #{tpu_custom_call.1} parent=39 // pred_region
          %p247 = scmp.lt.s32.totalorder %s31, 15
          %s248 = scalar_select %p247, %s31, 15
          %s249 = scalar_lea.vmem %s4, %s248
        $region48: #{tpu_custom_call.1} parent=39 // pred_fallthru
          _
      $region40: #{tpu_custom_call.1} parent=5 // pred_fallthru
        _
    $region6: #{tpu_custom_call.1} parent=1 // loop_footer
      %s29 = sadd.s32 1, %s25
    $region7: #{tpu_custom_call.1} parent=1 // loop_footer_branch
      %24 = sbr.rel target = $region3
    $region8: #{tpu_custom_call.1} parent=1 // loop_exit
      _
    %250 = vsyncpa [#allocation6], 1
    %s251 = scalar_lea.sflag [#allocation6], 1
    %252 = vsyncpa %s251, 1
    %253 = vsyncpa [#allocation7], 1
    %s254 = scalar_lea.sflag [#allocation7], 1
    %255 = vsyncpa %s254, 1

</llo_original>
